<compile_context>
chip_gen: v7x
topology: tpu7x:2x2x1
jax: 0.10.0
libtpu: 0.0.40
codegen_flags: <defaults>
</compile_context>

<pallas_src>
import jax
import jax.numpy as jnp
from jax import lax
from jax.experimental import pallas as pl
from jax.experimental.pallas import tpu as pltpu


def _fps_pool_kernel(in_ref, x_ref, y_ref, z_ref, out_ref, idx_scr):
    """in_ref: (Bb, D, N) transposed features; x/y/z_ref: (Bb, N) f32;
    out_ref: (Bb, D, Nc); idx_scr: VMEM (Bb, Nc) int32 scratch."""
    bb, d, n = in_ref.shape
    nc = out_ref.shape[2]

    # Lane-dense coordinate slabs (N on the 128-lane axis).
    x = x_ref[...]
    y = y_ref[...]
    z = z_ref[...]
    sq = x * x + y * y + z * z                                  # |p|^2, hoisted
    ids = lax.broadcasted_iota(jnp.int32, (bb, n), 1)           # point index (lanes)
    slot_ids = lax.broadcasted_iota(jnp.int32, (bb, nc), 1)     # output slot index
    big = jnp.int32(n)
    zeros = jnp.zeros_like(x)                                   # hoisted broadcast

    def fps_body(i, carry):
        distance, cx, cy, cz, idx_acc = carry                   # (bb,N), (bb,1)x3, (bb,Nc)
        csq = cx * cx + cy * cy + cz * cz                       # (bb, 1)
        # squared distance to the centroid selected for slot i (|p|^2 hoisted)
        dist_c = (sq + csq) - 2.0 * (x * cx + y * cy + z * cz)  # (bb, N)
        distance = jnp.minimum(distance, dist_c)
        # row-wise max, then first index achieving it (first-occurrence ties)
        maxval = jnp.max(distance, axis=1, keepdims=True)       # (bb, 1)
        masked = jnp.where(distance == maxval, ids, big)        # (bb, N) int32
        nxt = jnp.min(masked, axis=1, keepdims=True)            # (bb, 1) int32
        # centroid via mask-reduce: next iteration's dependency chain stays
        # entirely in the vector domain (no scalar round-trip).
        sel = ids == nxt                                        # (bb, N) bool
        ncx = jnp.sum(jnp.where(sel, x, zeros), axis=1, keepdims=True)
        ncy = jnp.sum(jnp.where(sel, y, zeros), axis=1, keepdims=True)
        ncz = jnp.sum(jnp.where(sel, z, zeros), axis=1, keepdims=True)
        # record selected index for slot i+1 with a cheap lane-select
        # (when i+1 == Nc nothing matches, i.e. the last pick is discarded,
        # matching the reference semantics).
        idx_acc = jnp.where(slot_ids == (i + 1), nxt, idx_acc)
        return distance, ncx, ncy, ncz, idx_acc

    dist0 = jnp.full((bb, n), 1e10, dtype=jnp.float32)
    idx0 = jnp.zeros((bb, nc), dtype=jnp.int32)                 # slot 0 = seed index 0
    _, _, _, _, idx_acc = lax.fori_loop(
        0, nc, fps_body, (dist0, x[:, 0:1], y[:, 0:1], z[:, 0:1], idx0))

    # Park the indices in VMEM so the gather loop can dynamically slice them.
    idx_scr[...] = idx_acc

    # Vectorized gather: one-hot matmul on the MXU per batch row.
    row_iota = lax.broadcasted_iota(jnp.int32, (n, nc), 0)      # hoisted

    def gather_body(b, _):
        idx_row = idx_scr[pl.ds(b, 1), :]                       # (1, Nc) int32
        onehot = (row_iota == idx_row).astype(jnp.float32)      # (N, Nc)
        in_row = in_ref[b].astype(jnp.float32)                  # (D, N)
        g = jnp.dot(in_row, onehot, preferred_element_type=jnp.float32)  # (D, Nc)
        out_ref[b] = g.astype(out_ref.dtype)
        return 0

    lax.fori_loop(0, bb, gather_body, 0)


def field_pooling(in_feature: jax.Array, center_number: int) -> jax.Array:
    """Pallas implementation of FieldPooling.forward.

    in_feature: (B, N, 3+Fin)
    returns:    (B, Nc, 3+Fin)
    """
    B, N, D = in_feature.shape
    assert D >= 3, "The input point cloud should be in 3D space!"
    Nc = int(center_number)

    # Batch rows processed per grid step (sublane axis of the working arrays).
    bb = B if B <= 8 else (8 if B % 8 == 0 else 1)
    assert B % bb == 0

    # Layout plumbing in the wrapper: lane-dense coordinate slabs and a
    # transposed feature slab so the in-kernel gather output is lane-dense.
    in_t = jnp.transpose(in_feature, (0, 2, 1))                 # (B, D, N)
    pts = in_feature[:, :, :3].astype(jnp.float32)
    xs = pts[:, :, 0]
    ys = pts[:, :, 1]
    zs = pts[:, :, 2]

    itemsize = jnp.dtype(in_feature.dtype).itemsize
    vmem_est = (2 * bb * D * N * itemsize        # transposed input block (double-buffered)
                + 2 * 3 * bb * N * 4             # x/y/z blocks
                + 2 * bb * D * Nc * itemsize     # output block
                + 12 * bb * N * 4                # FPS f32/i32 temporaries
                + 3 * N * Nc * 4                 # one-hot + compare temporaries
                + bb * Nc * 4                    # index scratch
                + (2 << 20))                     # headroom
    vmem_limit = int(min(100 * 2 ** 20, max(vmem_est, 16 * 2 ** 20)))

    out_t = pl.pallas_call(
        _fps_pool_kernel,
        out_shape=jax.ShapeDtypeStruct((B, D, Nc), in_feature.dtype),
        grid=(B // bb,),
        in_specs=[
            pl.BlockSpec((bb, D, N), lambda g: (g, 0, 0)),
            pl.BlockSpec((bb, N), lambda g: (g, 0)),
            pl.BlockSpec((bb, N), lambda g: (g, 0)),
            pl.BlockSpec((bb, N), lambda g: (g, 0)),
        ],
        out_specs=pl.BlockSpec((bb, D, Nc), lambda g: (g, 0, 0)),
        scratch_shapes=[pltpu.VMEM((bb, Nc), jnp.int32)],
        compiler_params=pltpu.CompilerParams(
            dimension_semantics=("parallel",),
            vmem_limit_bytes=vmem_limit),
    )(in_t, xs, ys, zs)

    return jnp.transpose(out_t, (0, 2, 1))                      # (B, Nc, D)


# ------------------- pure-JAX reference (same deterministic FPS) -------------------
def field_pooling_ref(in_feature: jax.Array, center_number: int) -> jax.Array:
    B, N, D = in_feature.shape
    Nc = int(center_number)
    pts = in_feature[:, :, :3].astype(jnp.float32)
    x, y, z = pts[:, :, 0], pts[:, :, 1], pts[:, :, 2]
    sq = x * x + y * y + z * z
    ids = jnp.broadcast_to(jnp.arange(N, dtype=jnp.int32)[None, :], (B, N))

    def body(i, carry):
        dist, cx, cy, cz, idxs = carry
        csq = cx * cx + cy * cy + cz * cz
        dc = (sq + csq) - 2.0 * (x * cx + y * cy + z * cz)
        dist = jnp.minimum(dist, dc)
        maxval = jnp.max(dist, axis=1, keepdims=True)
        masked = jnp.where(dist == maxval, ids, jnp.int32(N))
        nxt = jnp.min(masked, axis=1, keepdims=True)
        sel = ids == nxt
        ncx = jnp.sum(jnp.where(sel, x, 0.0), axis=1, keepdims=True)
        ncy = jnp.sum(jnp.where(sel, y, 0.0), axis=1, keepdims=True)
        ncz = jnp.sum(jnp.where(sel, z, 0.0), axis=1, keepdims=True)
        idxs = lax.dynamic_update_slice(idxs, nxt, (0, i + 1))
        return dist, ncx, ncy, ncz, idxs

    dist0 = jnp.full((B, N), 1e10, dtype=jnp.float32)
    idxs0 = jnp.zeros((B, Nc + 1), dtype=jnp.int32)
    _, _, _, _, idxs = lax.fori_loop(
        0, Nc, body, (dist0, x[:, 0:1], y[:, 0:1], z[:, 0:1], idxs0))
    sel_idx = idxs[:, :Nc]
    return jax.vmap(lambda f, idx: f[idx])(in_feature, sel_idx)


if __name__ == "__main__":
    key = jax.random.PRNGKey(0)
    B, N, Fin = 2, 16, 4          # input feature = (B, N, 3 + Fin)
    Nc = 8                        # center_number
    k_pts, k_feat = jax.random.split(key)
    points = jax.random.normal(k_pts, (B, N, 3), dtype=jnp.float32)
    feature = jax.random.normal(k_feat, (B, N, Fin), dtype=jnp.float32)
    in_feature = jnp.concatenate([points, feature], axis=-1)   # (B, N, 3+Fin)

    out = field_pooling(in_feature, Nc)
    jax.block_until_ready(out)

    ref = field_pooling_ref(in_feature, Nc)
    assert out.shape == (B, Nc, 3 + Fin), out.shape
    assert jnp.allclose(out, ref, atol=1e-5, rtol=1e-5), "mismatch vs reference FPS"

    print("KERNEL_OK")
</pallas_src>

<mosaic_0001>
module attributes {stable_mosaic.version = 11 : i64} {
  func.func @_fps_pool_kernel(%arg0: i32, %arg1: memref<2x7x16xf32, #tpu.memory_space<vmem>>, %arg2: memref<2x16xf32, #tpu.memory_space<vmem>>, %arg3: memref<2x16xf32, #tpu.memory_space<vmem>>, %arg4: memref<2x16xf32, #tpu.memory_space<vmem>>, %arg5: memref<2x7x8xf32, #tpu.memory_space<vmem>>, %arg6: memref<2x8xi32, #tpu.memory_space<vmem>>) attributes {dimension_semantics = [#tpu.dimension_semantics<parallel>], iteration_bounds = array<i64: 1>, scalar_prefetch = 0 : i64, scratch_operands = 1 : i64, tpu.core_type = #tpu.core_type<tc>, window_params = [{transform_indices = @transform_0, window_bounds = array<i64: 2, 7, 16>}, {transform_indices = @transform_1, window_bounds = array<i64: 2, 16>}, {transform_indices = @transform_2, window_bounds = array<i64: 2, 16>}, {transform_indices = @transform_3, window_bounds = array<i64: 2, 16>}, {transform_indices = @transform_4, window_bounds = array<i64: 2, 7, 8>}]} {
    %c0 = arith.constant 0 : index
    %c0_0 = arith.constant 0 : index
    %0 = vector.load %arg2[%c0, %c0_0] : memref<2x16xf32, #tpu.memory_space<vmem>>, vector<2x16xf32>
    %c0_1 = arith.constant 0 : index
    %c0_2 = arith.constant 0 : index
    %1 = vector.load %arg3[%c0_1, %c0_2] : memref<2x16xf32, #tpu.memory_space<vmem>>, vector<2x16xf32>
    %c0_3 = arith.constant 0 : index
    %c0_4 = arith.constant 0 : index
    %2 = vector.load %arg4[%c0_3, %c0_4] : memref<2x16xf32, #tpu.memory_space<vmem>>, vector<2x16xf32>
    %3 = arith.mulf %0, %0 : vector<2x16xf32>
    %4 = arith.mulf %1, %1 : vector<2x16xf32>
    %5 = arith.addf %3, %4 : vector<2x16xf32>
    %6 = arith.mulf %2, %2 : vector<2x16xf32>
    %7 = arith.addf %5, %6 : vector<2x16xf32>
    %8 = tpu.iota {dimensions = array<i32: 1>} : vector<2x16xi32>
    %9 = tpu.iota {dimensions = array<i32: 1>} : vector<2x8xi32>
    %cst = arith.constant 0.000000e+00 : f32
    %10 = vector.broadcast %cst : f32 to vector<2x16xf32>
    %cst_5 = arith.constant 1.000000e+10 : f32
    %11 = vector.broadcast %cst_5 : f32 to vector<2x16xf32>
    %c0_i32 = arith.constant 0 : i32
    %12 = vector.broadcast %c0_i32 : i32 to vector<2x8xi32>
    %13 = vector.extract_strided_slice %0 {offsets = [0, 0], sizes = [2, 1], strides = [1, 1]} : vector<2x16xf32> to vector<2x1xf32>
    %14 = vector.extract_strided_slice %1 {offsets = [0, 0], sizes = [2, 1], strides = [1, 1]} : vector<2x16xf32> to vector<2x1xf32>
    %15 = vector.extract_strided_slice %2 {offsets = [0, 0], sizes = [2, 1], strides = [1, 1]} : vector<2x16xf32> to vector<2x1xf32>
    %c16_i32 = arith.constant 16 : i32
    %c0_i32_6 = arith.constant 0 : i32
    %c8_i32 = arith.constant 8 : i32
    %16 = arith.addi %c0_i32_6, %c8_i32 : i32
    %c1_i32 = arith.constant 1 : i32
    %17:5 = scf.for %arg7 = %c0_i32_6 to %16 step %c1_i32 iter_args(%arg8 = %11, %arg9 = %13, %arg10 = %14, %arg11 = %15, %arg12 = %12) -> (vector<2x16xf32>, vector<2x1xf32>, vector<2x1xf32>, vector<2x1xf32>, vector<2x8xi32>)  : i32 {
      %21 = arith.mulf %arg9, %arg9 : vector<2x1xf32>
      %22 = arith.mulf %arg10, %arg10 : vector<2x1xf32>
      %23 = arith.addf %21, %22 : vector<2x1xf32>
      %24 = arith.mulf %arg11, %arg11 : vector<2x1xf32>
      %25 = arith.addf %23, %24 : vector<2x1xf32>
      %26 = vector.broadcast %25 : vector<2x1xf32> to vector<2x16xf32>
      %27 = arith.addf %7, %26 : vector<2x16xf32>
      %28 = vector.broadcast %arg9 : vector<2x1xf32> to vector<2x16xf32>
      %29 = arith.mulf %0, %28 : vector<2x16xf32>
      %30 = vector.broadcast %arg10 : vector<2x1xf32> to vector<2x16xf32>
      %31 = arith.mulf %1, %30 : vector<2x16xf32>
      %32 = arith.addf %29, %31 : vector<2x16xf32>
      %33 = vector.broadcast %arg11 : vector<2x1xf32> to vector<2x16xf32>
      %34 = arith.mulf %2, %33 : vector<2x16xf32>
      %35 = arith.addf %32, %34 : vector<2x16xf32>
      %cst_13 = arith.constant 2.000000e+00 : f32
      %36 = vector.broadcast %cst_13 : f32 to vector<2x16xf32>
      %37 = arith.mulf %36, %35 : vector<2x16xf32>
      %38 = arith.subf %27, %37 : vector<2x16xf32>
      %39 = arith.minimumf %arg8, %38 : vector<2x16xf32>
      %cst_14 = arith.constant dense<0xFF800000> : vector<2xf32>
      %40 = vector.multi_reduction <maximumf>, %39, %cst_14 [1] : vector<2x16xf32> to vector<2xf32>
      %41 = vector.shape_cast %40 : vector<2xf32> to vector<2x1xf32>
      %42 = vector.broadcast %41 : vector<2x1xf32> to vector<2x16xf32>
      %43 = arith.cmpf oeq, %39, %42 : vector<2x16xf32>
      %44 = vector.broadcast %c16_i32 : i32 to vector<2x16xi32>
      %45 = arith.select %43, %8, %44 : vector<2x16xi1>, vector<2x16xi32>
      %cst_15 = arith.constant dense<2147483647> : vector<2xi32>
      %46 = vector.multi_reduction <minsi>, %45, %cst_15 [1] : vector<2x16xi32> to vector<2xi32>
      %47 = vector.shape_cast %46 : vector<2xi32> to vector<2x1xi32>
      %48 = vector.broadcast %47 : vector<2x1xi32> to vector<2x16xi32>
      %49 = arith.cmpi eq, %8, %48 : vector<2x16xi32>
      %50 = arith.select %49, %0, %10 : vector<2x16xi1>, vector<2x16xf32>
      %cst_16 = arith.constant dense<0.000000e+00> : vector<2xf32>
      %51 = vector.multi_reduction <add>, %50, %cst_16 [1] : vector<2x16xf32> to vector<2xf32>
      %52 = vector.shape_cast %51 : vector<2xf32> to vector<2x1xf32>
      %53 = arith.select %49, %1, %10 : vector<2x16xi1>, vector<2x16xf32>
      %cst_17 = arith.constant dense<0.000000e+00> : vector<2xf32>
      %54 = vector.multi_reduction <add>, %53, %cst_17 [1] : vector<2x16xf32> to vector<2xf32>
      %55 = vector.shape_cast %54 : vector<2xf32> to vector<2x1xf32>
      %56 = arith.select %49, %2, %10 : vector<2x16xi1>, vector<2x16xf32>
      %cst_18 = arith.constant dense<0.000000e+00> : vector<2xf32>
      %57 = vector.multi_reduction <add>, %56, %cst_18 [1] : vector<2x16xf32> to vector<2xf32>
      %58 = vector.shape_cast %57 : vector<2xf32> to vector<2x1xf32>
      %c1_i32_19 = arith.constant 1 : i32
      %59 = arith.addi %arg7, %c1_i32_19 : i32
      %60 = vector.broadcast %59 : i32 to vector<2x8xi32>
      %61 = arith.cmpi eq, %9, %60 : vector<2x8xi32>
      %62 = vector.shape_cast %47 : vector<2x1xi32> to vector<2x1xi32>
      %63 = vector.broadcast %62 : vector<2x1xi32> to vector<2x8xi32>
      %64 = arith.select %61, %63, %arg12 : vector<2x8xi1>, vector<2x8xi32>
      scf.yield %39, %52, %55, %58, %64 : vector<2x16xf32>, vector<2x1xf32>, vector<2x1xf32>, vector<2x1xf32>, vector<2x8xi32>
    }
    %c8_i32_7 = arith.constant 8 : i32
    %c0_8 = arith.constant 0 : index
    %c0_9 = arith.constant 0 : index
    %18 = vector.load %arg6[%c0_8, %c0_9] : memref<2x8xi32, #tpu.memory_space<vmem>>, vector<2x8xi32>
    tpu.vector_store %arg6[%c0_8, %c0_9], %17#4 {strides = array<i32>} : memref<2x8xi32, #tpu.memory_space<vmem>>, vector<2x8xi32>,
    %19 = tpu.iota {dimensions = array<i32: 0>} : vector<16x8xi32>
    %c0_i32_10 = arith.constant 0 : i32
    %c2_i32 = arith.constant 2 : i32
    %20 = arith.addi %c0_i32_10, %c2_i32 : i32
    %c1_i32_11 = arith.constant 1 : i32
    scf.for %arg7 = %c0_i32_10 to %20 step %c1_i32_11  : i32 {
      %21 = arith.index_cast %arg7 : i32 to index
      %c0_13 = arith.constant 0 : index
      %22 = vector.load %arg6[%21, %c0_13] : memref<2x8xi32, #tpu.memory_space<vmem>>, vector<1x8xi32>
      %23 = vector.broadcast %22 : vector<1x8xi32> to vector<16x8xi32>
      %24 = arith.cmpi eq, %19, %23 : vector<16x8xi32>
      %25 = arith.extui %24 : vector<16x8xi1> to vector<16x8xi32>
      %26 = arith.sitofp %25 : vector<16x8xi32> to vector<16x8xf32>
      %27 = arith.index_cast %arg7 : i32 to index
      %c0_14 = arith.constant 0 : index
      %c0_15 = arith.constant 0 : index
      %28 = vector.load %arg1[%27, %c0_14, %c0_15] : memref<2x7x16xf32, #tpu.memory_space<vmem>>, vector<1x7x16xf32>
      %29 = vector.shape_cast %28 : vector<1x7x16xf32> to vector<7x16xf32>
      %cst_16 = arith.constant dense<0.000000e+00> : vector<7x8xf32>
      %30 = tpu.matmul %29, %26, %cst_16 {dimension_numbers = #tpu.dot_dimension_numbers<[1], [0], [0], [1], [0, 0, 1, 1], [], []>} : vector<7x16xf32>, vector<16x8xf32>, vector<7x8xf32> -> vector<7x8xf32>
      %31 = arith.index_cast %arg7 : i32 to index
      %c0_17 = arith.constant 0 : index
      %c0_18 = arith.constant 0 : index
      %32 = vector.load %arg5[%31, %c0_17, %c0_18] : memref<2x7x8xf32, #tpu.memory_space<vmem>>, vector<1x7x8xf32>
      %33 = vector.shape_cast %32 : vector<1x7x8xf32> to vector<7x8xf32>
      %34 = vector.shape_cast %30 : vector<7x8xf32> to vector<1x7x8xf32>
      tpu.vector_store %arg5[%31, %c0_17, %c0_18], %34 {strides = array<i32>} : memref<2x7x8xf32, #tpu.memory_space<vmem>>, vector<1x7x8xf32>,
    }
    %c2_i32_12 = arith.constant 2 : i32
    return
  }
  func.func @transform_0(%arg0: i32) -> (i32, i32, i32) {
    %c0_i32 = arith.constant 0 : i32
    %c0_i32_0 = arith.constant 0 : i32
    %c0_i32_1 = arith.constant 0 : i32
    return %arg0, %c0_i32, %c0_i32_0 : i32, i32, i32
  }
  func.func @transform_1(%arg0: i32) -> (i32, i32) {
    %c0_i32 = arith.constant 0 : i32
    %c0_i32_0 = arith.constant 0 : i32
    return %arg0, %c0_i32 : i32, i32
  }
  func.func @transform_2(%arg0: i32) -> (i32, i32) {
    %c0_i32 = arith.constant 0 : i32
    %c0_i32_0 = arith.constant 0 : i32
    return %arg0, %c0_i32 : i32, i32
  }
  func.func @transform_3(%arg0: i32) -> (i32, i32) {
    %c0_i32 = arith.constant 0 : i32
    %c0_i32_0 = arith.constant 0 : i32
    return %arg0, %c0_i32 : i32, i32
  }
  func.func @transform_4(%arg0: i32) -> (i32, i32, i32) {
    %c0_i32 = arith.constant 0 : i32
    %c0_i32_0 = arith.constant 0 : i32
    %c0_i32_1 = arith.constant 0 : i32
    return %arg0, %c0_i32, %c0_i32_0 : i32, i32, i32
  }
}

</mosaic_0001>

<llo_original>
// kernel: tpu_custom_call.1
$region0: #{tpu_custom_call.1}
  #allocation0 [shape = 'u32[]', space=smem, size = 0x4, offset = 0x4, fixed_abs, tag = 'smem constant byte address 0x4 - core index']
  #allocation1 [shape = 'u32[144,128]{1,0:T(1,128)}', space=vmem, size = 0x12000, scoped, tag = 'internal scratch']
  #allocation2 [shape = 's32[2,8]{1,0:T(2,128)}', space=vmem, size = 0x400, scoped, tag = 'scratch operand']
  %s0 = inlined_call_operand.vmem [shape: f32[2,7,16], index: 0, kind: input, shape index: {}]
  %s1 = inlined_call_operand.vmem [shape: f32[2,16], index: 1, kind: input, shape index: {}]
  %s2 = inlined_call_operand.vmem [shape: f32[2,16], index: 2, kind: input, shape index: {}]
  %s3 = inlined_call_operand.vmem [shape: f32[2,16], index: 3, kind: input, shape index: {}]
  %s4 = inlined_call_operand.vmem [shape: f32[2,7,8], index: 4, kind: output, shape index: {}]
  %s5 = sld [smem:[#allocation0]]
  $region40: #{tpu_custom_call.1} parent=0
    _
  %s7 = ssub.s32 1, %s5
  %s8 = scalar_select 0, %s7, %s5
  // Predicated region
  $region2: #{tpu_custom_call.1} parent=0 // pred_check
    _
  $region3: #{tpu_custom_call.1} parent=0 // pred_check_branch
    %10 = sbr.rel (0) target = $region5
  $region4: #{tpu_custom_call.1} parent=0 // pred_region
    _
  $region5: #{tpu_custom_call.1} parent=0 // pred_fallthru
    _
  // Predicated region
  $region6: #{tpu_custom_call.1} parent=0 // pred_check
    _
  $region7: #{tpu_custom_call.1} parent=0 // pred_check_branch
    %12 = sbr.rel (0) target = $region9
  $region8: #{tpu_custom_call.1} parent=0 // pred_region
    _
  $region9: #{tpu_custom_call.1} parent=0 // pred_fallthru
    _
  // Predicated region
  $region10: #{tpu_custom_call.1} parent=0 // pred_check
    _
  $region11: #{tpu_custom_call.1} parent=0 // pred_check_branch
    %14 = sbr.rel (0) target = $region13
  $region12: #{tpu_custom_call.1} parent=0 // pred_region
    _
  $region13: #{tpu_custom_call.1} parent=0 // pred_fallthru
    _
  // Predicated region
  $region14: #{tpu_custom_call.1} parent=0 // pred_check
    _
  $region15: #{tpu_custom_call.1} parent=0 // pred_check_branch
    %16 = sbr.rel (0) target = $region17
  $region16: #{tpu_custom_call.1} parent=0 // pred_region
    _
  $region17: #{tpu_custom_call.1} parent=0 // pred_fallthru
    _
  %v17 = vld [vmem:[%s1] sm:$0x3]
  %v18 = vld [vmem:[%s2] sm:$0x3]
  %v19 = vld [vmem:[%s3] sm:$0x3]
  %v20 = vmul.f32 %v17, %v17
  %v21 = vmul.f32 %v18, %v18
  %v22 = vadd.f32 %v20, %v21
  %v23 = vmul.f32 %v19, %v19
  %v24 = vadd.f32 %v22, %v23
  %v25 = vlaneseq
  %v26 = vand.u32 %v25, 127
  loop: start=0, step=1, limit=8
  $region18: #{tpu_custom_call.1} parent=0 // loop_pre_header
    _
  $region19: #{tpu_custom_call.1} parent=0 // loop_header
    %s28 = sphi 0, %s32
    %p29 = scmp.ge.s32.totalorder %s28, 8
    %v33 = vphi 1e+10, %v71
    %v34 = vphi %v17, %v97
    %v35 = vphi %v18, %v101
    %v36 = vphi %v19, %v105
    %v37 = vphi 0, %v109
  $region20: #{tpu_custom_call.1} parent=0 // loop_header_branch
    %31 = sbr.rel (%p29) target = $region24
  $region21: #{tpu_custom_call.1} parent=0 // loop_body
    %v38 = vmul.f32 %v34, %v34
    %v39 = vmul.f32 %v35, %v35
    %v40 = vadd.f32 %v38, %v39
    %v41 = vmul.f32 %v36, %v36
    %v42 = vadd.f32 %v40, %v41
    %44 = vset.pattern.permute.xlu0 0
    %45 = vperm.xlu0 %44, %v42
    %v46 = vpop.permute.xlu0 %45
    %v48 = vadd.f32 %v24, %v46
    %50 = vset.pattern.permute.xlu0 0
    %51 = vperm.xlu0 %50, %v34
    %v52 = vpop.permute.xlu0 %51
    %v54 = vmul.f32 %v17, %v52
    %56 = vset.pattern.permute.xlu0 0
    %57 = vperm.xlu0 %56, %v35
    %v58 = vpop.permute.xlu0 %57
    %v60 = vmul.f32 %v18, %v58
    %v61 = vadd.f32 %v54, %v60
    %63 = vset.pattern.permute.xlu0 0
    %64 = vperm.xlu0 %63, %v36
    %v65 = vpop.permute.xlu0 %64
    %v67 = vmul.f32 %v19, %v65
    %v68 = vadd.f32 %v61, %v67
    %v69 = vmul.f32 %v68, 2.0
    %v70 = vsub.f32 %v48, %v69
    %v71 = vmin.f32 %v33, %v70
    %vm72 = vcmask 123904
    %v73 = vsel %vm72, %v71, -inf
    %74 = vmax.xlane.f32.xlu0 %v73
    %v75 = vpop.xlane.xlu0 %74
    %vm76 = vcmp.eq.f32.partialorder %v71, %v75
    %v77 = vsel %vm76, %v26, 16
    %v78 = vsel %vm72, %v77, 2147483647
    %v79 = vand.u32 %v78, 65535
    %v80 = vshra.s32 %v78, 16
    %v81 = vcvt.s32.f32 %v79
    %v82 = vcvt.s32.f32 %v80
    %83 = vmin.xlane.f32.xlu0 %v82
    %v84 = vpop.xlane.xlu0 %83
    %vm85 = vcmp.eq.f32.partialorder %v82, %v84
    %v86 = vsel %vm85, %v81, inf
    %87 = vmin.xlane.f32.xlu0 %v86
    %v88 = vpop.xlane.xlu0 %87
    %v89 = vcvt.f32.s32 %v88
    %v90 = vcvt.f32.s32 %v84
    %v91 = vshll.u32 %v90, 16
    %v92 = vadd.s32 %v91, %v89
    %vm93 = vcmp.eq.s32.totalorder %v26, %v92
    %v94 = vsel %vm93, %v17, 0.0
    %v95 = vsel %vm72, %v94, 0.0
    %96 = vadd.xlane.f32.xlu0 %v95
    %v97 = vpop.xlane.xlu0 %96
    %v98 = vsel %vm93, %v18, 0.0
    %v99 = vsel %vm72, %v98, 0.0
    %100 = vadd.xlane.f32.xlu0 %v99
    %v101 = vpop.xlane.xlu0 %100
    %v102 = vsel %vm93, %v19, 0.0
    %v103 = vsel %vm72, %v102, 0.0
    %104 = vadd.xlane.f32.xlu0 %v103
    %v105 = vpop.xlane.xlu0 %104
    %s106 = sadd.s32 %s28, 1
    %v107 = vstv %s106
    %vm108 = vcmp.eq.s32.totalorder %v26, %v107
    %v109 = vsel %vm108, %v92, %v37
  $region22: #{tpu_custom_call.1} parent=0 // loop_footer
    %s32 = sadd.s32 1, %s28
  $region23: #{tpu_custom_call.1} parent=0 // loop_footer_branch
    %27 = sbr.rel target = $region19
  $region24: #{tpu_custom_call.1} parent=0 // loop_exit
    _
  %vm110 = vcmask 58368
  %111 = vst.msk [vmem:[#allocation2] sm:$0x3] %vm110, %v37
  %v112 = vlaneseq
  %v113 = vshrl.u32 %v112, 7
  %v114 = vadd.s32 %v113, 8
  loop: start=0, step=1, limit=2
  $region25: #{tpu_custom_call.1} parent=0 // loop_pre_header
    _
  $region26: #{tpu_custom_call.1} parent=0 // loop_header
    %s116 = sphi 0, %s120
    %p117 = scmp.ge.s32.totalorder %s116, 2
  $region27: #{tpu_custom_call.1} parent=0 // loop_header_branch
    %119 = sbr.rel (%p117) target = $region31
  $region28: #{tpu_custom_call.1} parent=0 // loop_body
    %s121 = scalar_lea.vmem [#allocation2], %s116
    %v122 = vld [vmem:[%s121] sm:$0x1]
    %v123 = vlaneseq
    %v124 = vshrl.u32 %v123, 7
    %v125 = vsub.s32 0, %v124
    %v126 = vrot.slane %v122, %v125
    %vm127 = vcmp.eq.s32.totalorder %v113, %v126
    %vm128 = vcmp.eq.s32.totalorder %v114, %v126
    %v129 = vsel %vm127, 1, 0
    %v130 = vsel %vm128, 1, 0
    %v131 = vcvt.s32.f32 %v129
    %v132 = vcvt.s32.f32 %v130
    %s133 = smul.u32 %s116, 8
    %s134 = scalar_lea.vmem %s0, %s133
    %v135 = vld [vmem:[%s134] sm:$0x7f]
    %vm136 = vcmask 130048
    %v138 = vsel %vm136, %v135, 0
    %140 = vmatprep.subr.mxu0 0.0
    %141 = vmatpush1.msra.mxu0 %v131
    %142 = vmatprep.subr.mxu0 0.0
    %143 = vmatpush1.msra.mxu0 %v132
    %144 = vmatprep.subr.mxu0 0.0
    %145 = vmatpush1.msra.mxu0 0.0
    %146 = vmatprep.subr.mxu0 0.0
    %147 = vmatpush1.msra.mxu0 0.0
    %148 = vmatprep.subr.mxu0 0.0
    %149 = vmatpush1.msra.mxu0 0.0
    %150 = vmatprep.subr.mxu0 0.0
    %151 = vmatpush1.msra.mxu0 0.0
    %152 = vmatprep.subr.mxu0 0.0
    %153 = vmatpush1.msra.mxu0 0.0
    %154 = vmatprep.subr.mxu0 0.0
    %155 = vmatpush1.msra.mxu0 0.0
    %156 = vmatprep.subr.mxu0 0.0
    %157 = vmatpush1.msra.mxu0 0.0
    %158 = vmatprep.subr.mxu0 0.0
    %159 = vmatpush1.msra.mxu0 0.0
    %160 = vmatprep.subr.mxu0 0.0
    %161 = vmatpush1.msra.mxu0 0.0
    %162 = vmatprep.subr.mxu0 0.0
    %163 = vmatpush1.msra.mxu0 0.0
    %164 = vmatprep.subr.mxu0 0.0
    %165 = vmatpush1.msra.mxu0 0.0
    %166 = vmatprep.subr.mxu0 0.0
    %167 = vmatpush1.msra.mxu0 0.0
    %168 = vmatprep.subr.mxu0 0.0
    %169 = vmatpush1.msra.mxu0 0.0
    %170 = vmatprep.subr.mxu0 0.0
    %171 = vmatpush1.msra.mxu0 0.0
    %172 = vmatprep.subr.mxu0 0.0
    %173 = vmatpush1.msra.mxu0 0.0
    %174 = vmatprep.subr.mxu0 0.0
    %175 = vmatpush1.msra.mxu0 0.0
    %176 = vmatprep.subr.mxu0 0.0
    %177 = vmatpush1.msra.mxu0 0.0
    %178 = vmatprep.subr.mxu0 0.0
    %179 = vmatpush1.msra.mxu0 0.0
    %180 = vmatprep.subr.mxu0 0.0
    %181 = vmatpush1.msra.mxu0 0.0
    %182 = vmatprep.subr.mxu0 0.0
    %183 = vmatpush1.msra.mxu0 0.0
    %184 = vmatprep.subr.mxu0 0.0
    %185 = vmatpush1.msra.mxu0 0.0
    %186 = vmatprep.subr.mxu0 0.0
    %187 = vmatpush1.msra.mxu0 0.0
    %188 = vmatprep.subr.mxu0 0.0
    %189 = vmatpush1.msra.mxu0 0.0
    %190 = vmatprep.subr.mxu0 0.0
    %191 = vmatpush1.msra.mxu0 0.0
    %192 = vmatprep.subr.mxu0 0.0
    %193 = vmatpush1.msra.mxu0 0.0
    %194 = vmatprep.subr.mxu0 0.0
    %195 = vmatpush1.msra.mxu0 0.0
    %196 = vmatprep.subr.mxu0 0.0
    %197 = vmatpush1.msra.mxu0 0.0
    %198 = vmatprep.subr.mxu0 0.0
    %199 = vmatpush1.msra.mxu0 0.0
    %200 = vmatprep.subr.mxu0 0.0
    %201 = vmatpush1.msra.mxu0 0.0
    %202 = vmatprep.subr.mxu0 0.0
    %203 = vmatpush1.msra.mxu0 0.0
    %204 = vmatprep.mubr.f32.mxu0 0.0
    %205 = vmatmul.mubr.f32.gmra.mrb[0].mxu0 %v138
    %v206 = vpop.f32.mrb[0].mxu0
    %v207 = vadd.f32 0.0, %v206
    %v208 = vpop.f32.mrb[0].mxu0
    %209 = vdwg.mxu0
    %s210 = scalar_lea.vmem %s4, %s133
    %vm211 = vcmask 63488
    %212 = vst.msk [vmem:[%s210] sm:$0x7f] %vm211, %v207
  $region29: #{tpu_custom_call.1} parent=0 // loop_footer
    %s120 = sadd.s32 1, %s116
  $region30: #{tpu_custom_call.1} parent=0 // loop_footer_branch
    %115 = sbr.rel target = $region26
  $region31: #{tpu_custom_call.1} parent=0 // loop_exit
    _
  // Predicated region
  $region32: #{tpu_custom_call.1} parent=0 // pred_check
    _
  $region33: #{tpu_custom_call.1} parent=0 // pred_check_branch
    %214 = sbr.rel (0) target = $region35
  $region34: #{tpu_custom_call.1} parent=0 // pred_region
    _
  $region35: #{tpu_custom_call.1} parent=0 // pred_fallthru
    _
  // Predicated region
  $region36: #{tpu_custom_call.1} parent=0 // pred_check
    _
  $region37: #{tpu_custom_call.1} parent=0 // pred_check_branch
    %216 = sbr.rel (0) target = $region39
  $region38: #{tpu_custom_call.1} parent=0 // pred_region
    _
  $region39: #{tpu_custom_call.1} parent=0 // pred_fallthru
    _

</llo_original>
